<compile_context>
chip_gen: v6e
topology: v6e:2x2x1
jax: 0.10.0
libtpu: 0.0.40
codegen_flags: <defaults>
</compile_context>

<pallas_src>
import functools

import jax
import jax.numpy as jnp
from jax.experimental import pallas as pl
from jax.experimental.pallas import tpu as pltpu

# Logical sizes from the PyTorch module.
D_IN, D_H1, D_H2, D_OUT = 4, 12, 8, 3

# Padded (TPU-friendly) sizes.
LANE = 128      # hidden activations live on full 128-lane vregs (VMEM only)
X_PAD = 8       # input features padded 4 -> 8 (HBM stream stays narrow)
OUT_PAD = 8     # output features padded 3 -> 8 (narrow HBM writeback, sliced in wrapper)
SUBLANE = 8
TM_DEFAULT = 2048  # batch tile; 2 bufs x (in+out) x TM x 8 x 4B + ~2 MiB intermediates << VMEM


def _round_up(n, m):
    return ((n + m - 1) // m) * m


def _mlp_kernel(x_ref, w1_ref, b1_ref, w2_ref, b2_ref, w3_ref, b3_ref, o_ref):
    """Fused fc1 -> relu -> fc2 -> relu -> fc3 on one (TM, X_PAD) batch tile."""
    cdt = w1_ref.dtype  # compute dtype (f32 or bf16); accumulation is always f32
    x = x_ref[...]
    h1 = jnp.dot(x, w1_ref[...], preferred_element_type=jnp.float32) + b1_ref[...]
    h1 = jnp.maximum(h1, 0.0).astype(cdt)
    h2 = jnp.dot(h1, w2_ref[...], preferred_element_type=jnp.float32) + b2_ref[...]
    h2 = jnp.maximum(h2, 0.0).astype(cdt)
    out = jnp.dot(h2, w3_ref[...], preferred_element_type=jnp.float32) + b3_ref[...]
    o_ref[...] = out.astype(o_ref.dtype)


def _pad2d(a, rows, cols):
    r, c = a.shape
    return jnp.pad(a, ((0, rows - r), (0, cols - c)))


@functools.partial(jax.jit, static_argnames=("compute_dtype", "tm"))
def iris_net_forward(x, params, compute_dtype=jnp.float32, tm=TM_DEFAULT):
    """x: (B, 4) float32.  params: dict of (w1,b1,w2,b2,w3,b3) in (in, out) layout."""
    b = x.shape[0]
    tm = min(tm, _round_up(b, SUBLANE))       # don't pick a tile bigger than the batch
    b_pad = _round_up(b, tm)
    grid = (pl.cdiv(b_pad, tm),)

    # Narrow HBM streams: (B_pad, 8) in, (B_pad, 8) out.  Zero padding is inert:
    # padded weight rows/cols and padded biases are 0, and relu(0) = 0.
    x_p = _pad2d(x.astype(compute_dtype), b_pad, X_PAD)
    w1 = _pad2d(params["w1"], X_PAD, LANE).astype(compute_dtype)    # (8, 128)
    w2 = _pad2d(params["w2"], LANE, LANE).astype(compute_dtype)     # (128, 128)
    w3 = _pad2d(params["w3"], LANE, OUT_PAD).astype(compute_dtype)  # (128, 8)
    b1 = _pad2d(params["b1"][None, :], 1, LANE)                     # (1, 128) f32
    b2 = _pad2d(params["b2"][None, :], 1, LANE)                     # (1, 128) f32
    b3 = _pad2d(params["b3"][None, :], 1, OUT_PAD)                  # (1, 8)   f32

    const = lambda shape: pl.BlockSpec(shape, lambda i: (0, 0))  # resident weights/biases

    out_pad = pl.pallas_call(
        _mlp_kernel,
        out_shape=jax.ShapeDtypeStruct((b_pad, OUT_PAD), jnp.float32),
        grid=grid,
        in_specs=[
            pl.BlockSpec((tm, X_PAD), lambda i: (i, 0)),  # x: streamed per batch tile
            const((X_PAD, LANE)),                         # w1
            const((1, LANE)),                             # b1
            const((LANE, LANE)),                          # w2
            const((1, LANE)),                             # b2
            const((LANE, OUT_PAD)),                       # w3
            const((1, OUT_PAD)),                          # b3
        ],
        out_specs=pl.BlockSpec((tm, OUT_PAD), lambda i: (i, 0)),
        compiler_params=pltpu.CompilerParams(
            dimension_semantics=("parallel",),            # batch tiles shard across TCs (v7x)
            vmem_limit_bytes=16 * 1024 * 1024,            # explicit, portable budget
        ),
    )(x_p, w1, b1, w2, b2, w3, b3)

    return out_pad[:b, :D_OUT]


def init_params(key):
    """Deterministic init mimicking nn.Linear default (U[-1/sqrt(fan_in), +])."""
    ks = jax.random.split(key, 6)

    def linear(kw, kb, fan_in, fan_out):
        bound = 1.0 / jnp.sqrt(jnp.float32(fan_in))
        # PyTorch stores weight as (out, in); we keep (in, out) for x @ W.
        w = jax.random.uniform(kw, (fan_in, fan_out), jnp.float32, -bound, bound)
        b = jax.random.uniform(kb, (fan_out,), jnp.float32, -bound, bound)
        return w, b

    w1, b1 = linear(ks[0], ks[1], D_IN, D_H1)
    w2, b2 = linear(ks[2], ks[3], D_H1, D_H2)
    w3, b3 = linear(ks[4], ks[5], D_H2, D_OUT)
    return {"w1": w1, "b1": b1, "w2": w2, "b2": b2, "w3": w3, "b3": b3}


def _reference(x, p):
    h1 = jnp.maximum(x @ p["w1"] + p["b1"], 0.0)
    h2 = jnp.maximum(h1 @ p["w2"] + p["b2"], 0.0)
    return h2 @ p["w3"] + p["b3"]


if __name__ == "__main__":
    key = jax.random.PRNGKey(0)
    k_x, k_p = jax.random.split(key)

    batch = 32
    x = jax.random.normal(k_x, (batch, D_IN), jnp.float32)
    params = init_params(k_p)
    ref = _reference(x, params)

    # f32 path (exact semantics of the PyTorch module).
    out = jax.block_until_ready(iris_net_forward(x, params))
    assert out.shape == (batch, D_OUT), out.shape
    assert jnp.allclose(out, ref, atol=1e-5, rtol=1e-5), (out, ref)

    # Multi-step batch grid (exercises the pipelined batch tiling: grid=(4,)).
    out_tiled = jax.block_until_ready(iris_net_forward(x, params, tm=8))
    assert jnp.allclose(out_tiled, ref, atol=1e-5, rtol=1e-5), (out_tiled, ref)

    # bf16 compute path (MXU-native on v5e/v6e/v7x); f32 accumulate, loose tolerance.
    out_bf16 = jax.block_until_ready(
        iris_net_forward(x, params, compute_dtype=jnp.bfloat16)
    )
    assert out_bf16.shape == (batch, D_OUT), out_bf16.shape
    assert jnp.allclose(out_bf16, ref, atol=5e-2, rtol=5e-2), (out_bf16, ref)

    print("KERNEL_OK")
</pallas_src>

<mosaic_0001>
module attributes {stable_mosaic.version = 11 : i64} {
  func.func @_mlp_kernel(%arg0: i32, %arg1: memref<32x8xf32, #tpu.memory_space<vmem>>, %arg2: memref<8x128xf32, #tpu.memory_space<vmem>>, %arg3: memref<1x128xf32, #tpu.memory_space<vmem>>, %arg4: memref<128x128xf32, #tpu.memory_space<vmem>>, %arg5: memref<1x128xf32, #tpu.memory_space<vmem>>, %arg6: memref<128x8xf32, #tpu.memory_space<vmem>>, %arg7: memref<1x8xf32, #tpu.memory_space<vmem>>, %arg8: memref<32x8xf32, #tpu.memory_space<vmem>>) attributes {dimension_semantics = [#tpu.dimension_semantics<parallel>], iteration_bounds = array<i64: 1>, scalar_prefetch = 0 : i64, scratch_operands = 0 : i64, tpu.core_type = #tpu.core_type<tc>, window_params = [{transform_indices = @transform_0, window_bounds = array<i64: 32, 8>}, {pipeline_mode = #tpu.pipeline_mode<synchronous>, transform_indices = @transform_1, window_bounds = array<i64: 8, 128>}, {pipeline_mode = #tpu.pipeline_mode<synchronous>, transform_indices = @transform_2, window_bounds = array<i64: 1, 128>}, {pipeline_mode = #tpu.pipeline_mode<synchronous>, transform_indices = @transform_3, window_bounds = array<i64: 128, 128>}, {pipeline_mode = #tpu.pipeline_mode<synchronous>, transform_indices = @transform_4, window_bounds = array<i64: 1, 128>}, {pipeline_mode = #tpu.pipeline_mode<synchronous>, transform_indices = @transform_5, window_bounds = array<i64: 128, 8>}, {pipeline_mode = #tpu.pipeline_mode<synchronous>, transform_indices = @transform_6, window_bounds = array<i64: 1, 8>}, {transform_indices = @transform_7, window_bounds = array<i64: 32, 8>}]} {
    %c0 = arith.constant 0 : index
    %c0_0 = arith.constant 0 : index
    %0 = vector.load %arg1[%c0, %c0_0] : memref<32x8xf32, #tpu.memory_space<vmem>>, vector<32x8xf32>
    %c0_1 = arith.constant 0 : index
    %c0_2 = arith.constant 0 : index
    %1 = vector.load %arg2[%c0_1, %c0_2] : memref<8x128xf32, #tpu.memory_space<vmem>>, vector<8x128xf32>
    %cst = arith.constant dense<0.000000e+00> : vector<32x128xf32>
    %2 = tpu.matmul %0, %1, %cst {dimension_numbers = #tpu.dot_dimension_numbers<[1], [0], [0], [1], [0, 0, 1, 1], [], []>} : vector<32x8xf32>, vector<8x128xf32>, vector<32x128xf32> -> vector<32x128xf32>
    %c0_3 = arith.constant 0 : index
    %c0_4 = arith.constant 0 : index
    %3 = vector.load %arg3[%c0_3, %c0_4] : memref<1x128xf32, #tpu.memory_space<vmem>>, vector<1x128xf32>
    %4 = vector.broadcast %3 : vector<1x128xf32> to vector<32x128xf32>
    %5 = arith.addf %2, %4 : vector<32x128xf32>
    %cst_5 = arith.constant 0.000000e+00 : f32
    %6 = vector.broadcast %cst_5 : f32 to vector<32x128xf32>
    %7 = arith.maximumf %5, %6 : vector<32x128xf32>
    %c0_6 = arith.constant 0 : index
    %c0_7 = arith.constant 0 : index
    %8 = vector.load %arg4[%c0_6, %c0_7] : memref<128x128xf32, #tpu.memory_space<vmem>>, vector<128x128xf32>
    %cst_8 = arith.constant dense<0.000000e+00> : vector<32x128xf32>
    %9 = tpu.matmul %7, %8, %cst_8 {dimension_numbers = #tpu.dot_dimension_numbers<[1], [0], [0], [1], [0, 0, 1, 1], [], []>} : vector<32x128xf32>, vector<128x128xf32>, vector<32x128xf32> -> vector<32x128xf32>
    %c0_9 = arith.constant 0 : index
    %c0_10 = arith.constant 0 : index
    %10 = vector.load %arg5[%c0_9, %c0_10] : memref<1x128xf32, #tpu.memory_space<vmem>>, vector<1x128xf32>
    %11 = vector.broadcast %10 : vector<1x128xf32> to vector<32x128xf32>
    %12 = arith.addf %9, %11 : vector<32x128xf32>
    %cst_11 = arith.constant 0.000000e+00 : f32
    %13 = vector.broadcast %cst_11 : f32 to vector<32x128xf32>
    %14 = arith.maximumf %12, %13 : vector<32x128xf32>
    %c0_12 = arith.constant 0 : index
    %c0_13 = arith.constant 0 : index
    %15 = vector.load %arg6[%c0_12, %c0_13] : memref<128x8xf32, #tpu.memory_space<vmem>>, vector<128x8xf32>
    %cst_14 = arith.constant dense<0.000000e+00> : vector<32x8xf32>
    %16 = tpu.matmul %14, %15, %cst_14 {dimension_numbers = #tpu.dot_dimension_numbers<[1], [0], [0], [1], [0, 0, 1, 1], [], []>} : vector<32x128xf32>, vector<128x8xf32>, vector<32x8xf32> -> vector<32x8xf32>
    %c0_15 = arith.constant 0 : index
    %c0_16 = arith.constant 0 : index
    %17 = vector.load %arg7[%c0_15, %c0_16] : memref<1x8xf32, #tpu.memory_space<vmem>>, vector<1x8xf32>
    %18 = vector.broadcast %17 : vector<1x8xf32> to vector<32x8xf32>
    %19 = arith.addf %16, %18 : vector<32x8xf32>
    %c0_17 = arith.constant 0 : index
    %c0_18 = arith.constant 0 : index
    %20 = vector.load %arg8[%c0_17, %c0_18] : memref<32x8xf32, #tpu.memory_space<vmem>>, vector<32x8xf32>
    tpu.vector_store %arg8[%c0_17, %c0_18], %19 {strides = array<i32>} : memref<32x8xf32, #tpu.memory_space<vmem>>, vector<32x8xf32>,
    return
  }
  func.func @transform_0(%arg0: i32) -> (i32, i32) {
    %c0_i32 = arith.constant 0 : i32
    %c0_i32_0 = arith.constant 0 : i32
    return %arg0, %c0_i32 : i32, i32
  }
  func.func @transform_1(%arg0: i32) -> (i32, i32) {
    %c0_i32 = arith.constant 0 : i32
    %c0_i32_0 = arith.constant 0 : i32
    %c0_i32_1 = arith.constant 0 : i32
    return %c0_i32, %c0_i32_0 : i32, i32
  }
  func.func @transform_2(%arg0: i32) -> (i32, i32) {
    %c0_i32 = arith.constant 0 : i32
    %c0_i32_0 = arith.constant 0 : i32
    %c0_i32_1 = arith.constant 0 : i32
    return %c0_i32, %c0_i32_0 : i32, i32
  }
  func.func @transform_3(%arg0: i32) -> (i32, i32) {
    %c0_i32 = arith.constant 0 : i32
    %c0_i32_0 = arith.constant 0 : i32
    %c0_i32_1 = arith.constant 0 : i32
    return %c0_i32, %c0_i32_0 : i32, i32
  }
  func.func @transform_4(%arg0: i32) -> (i32, i32) {
    %c0_i32 = arith.constant 0 : i32
    %c0_i32_0 = arith.constant 0 : i32
    %c0_i32_1 = arith.constant 0 : i32
    return %c0_i32, %c0_i32_0 : i32, i32
  }
  func.func @transform_5(%arg0: i32) -> (i32, i32) {
    %c0_i32 = arith.constant 0 : i32
    %c0_i32_0 = arith.constant 0 : i32
    %c0_i32_1 = arith.constant 0 : i32
    return %c0_i32, %c0_i32_0 : i32, i32
  }
  func.func @transform_6(%arg0: i32) -> (i32, i32) {
    %c0_i32 = arith.constant 0 : i32
    %c0_i32_0 = arith.constant 0 : i32
    %c0_i32_1 = arith.constant 0 : i32
    return %c0_i32, %c0_i32_0 : i32, i32
  }
  func.func @transform_7(%arg0: i32) -> (i32, i32) {
    %c0_i32 = arith.constant 0 : i32
    %c0_i32_0 = arith.constant 0 : i32
    return %arg0, %c0_i32 : i32, i32
  }
}

</mosaic_0001>

<llo_original>
// kernel: iris_net_forward.1
$region0: #{iris_net_forward.1}
  #allocation0 [shape = 'u32[]', space=smem, size = 0x4, offset = 0x4, fixed_abs, tag = 'smem constant byte address 0x4 - core index']
  #allocation1 [shape = 'u32[144,128]{1,0:T(1,128)}', space=vmem, size = 0x12000, scoped, tag = 'internal scratch']
  %s0 = inlined_call_operand.vmem [shape: f32[32,8], index: 0, kind: input, shape index: {}]
  %s1 = inlined_call_operand.vmem [shape: f32[8,128], index: 1, kind: input, shape index: {}]
  %s2 = inlined_call_operand.vmem [shape: f32[1,128], index: 2, kind: input, shape index: {}]
  %s3 = inlined_call_operand.vmem [shape: f32[128,128], index: 3, kind: input, shape index: {}]
  %s4 = inlined_call_operand.vmem [shape: f32[1,128], index: 4, kind: input, shape index: {}]
  %s5 = inlined_call_operand.vmem [shape: f32[128,8], index: 5, kind: input, shape index: {}]
  %s6 = inlined_call_operand.vmem [shape: f32[1,8], index: 6, kind: input, shape index: {}]
  %s7 = inlined_call_operand.vmem [shape: f32[32,8], index: 7, kind: output, shape index: {}]
  %s8 = sld [smem:[#allocation0]]
  $region38: #{iris_net_forward.1} parent=0
    _
  %s10 = ssub.s32 1, %s8
  %s11 = scalar_select 0, %s10, %s8
  // Predicated region
  $region2: #{iris_net_forward.1} parent=0 // pred_check
    _
  $region3: #{iris_net_forward.1} parent=0 // pred_check_branch
    %13 = sbr.rel (0) target = $region5
  $region4: #{iris_net_forward.1} parent=0 // pred_region
    _
  $region5: #{iris_net_forward.1} parent=0 // pred_fallthru
    _
  // Predicated region
  $region6: #{iris_net_forward.1} parent=0 // pred_check
    _
  $region7: #{iris_net_forward.1} parent=0 // pred_check_branch
    %15 = sbr.rel (0) target = $region9
  $region8: #{iris_net_forward.1} parent=0 // pred_region
    _
  $region9: #{iris_net_forward.1} parent=0 // pred_fallthru
    _
  // Predicated region
  $region10: #{iris_net_forward.1} parent=0 // pred_check
    _
  $region11: #{iris_net_forward.1} parent=0 // pred_check_branch
    %17 = sbr.rel (0) target = $region13
  $region12: #{iris_net_forward.1} parent=0 // pred_region
    _
  $region13: #{iris_net_forward.1} parent=0 // pred_fallthru
    _
  // Predicated region
  $region14: #{iris_net_forward.1} parent=0 // pred_check
    _
  $region15: #{iris_net_forward.1} parent=0 // pred_check_branch
    %19 = sbr.rel (0) target = $region17
  $region16: #{iris_net_forward.1} parent=0 // pred_region
    _
  $region17: #{iris_net_forward.1} parent=0 // pred_fallthru
    _
  // Predicated region
  $region18: #{iris_net_forward.1} parent=0 // pred_check
    _
  $region19: #{iris_net_forward.1} parent=0 // pred_check_branch
    %21 = sbr.rel (0) target = $region21
  $region20: #{iris_net_forward.1} parent=0 // pred_region
    _
  $region21: #{iris_net_forward.1} parent=0 // pred_fallthru
    _
  // Predicated region
  $region22: #{iris_net_forward.1} parent=0 // pred_check
    _
  $region23: #{iris_net_forward.1} parent=0 // pred_check_branch
    %23 = sbr.rel (0) target = $region25
  $region24: #{iris_net_forward.1} parent=0 // pred_region
    _
  $region25: #{iris_net_forward.1} parent=0 // pred_fallthru
    _
  // Predicated region
  $region26: #{iris_net_forward.1} parent=0 // pred_check
    _
  $region27: #{iris_net_forward.1} parent=0 // pred_check_branch
    %25 = sbr.rel (0) target = $region29
  $region28: #{iris_net_forward.1} parent=0 // pred_region
    _
  $region29: #{iris_net_forward.1} parent=0 // pred_fallthru
    _
  %v26 = vld [vmem:[%s0] sm:$0xff]
  %v27 = vld [vmem:[%s0 + $0x8] sm:$0xff]
  %v28 = vld [vmem:[%s0 + $0x10] sm:$0xff]
  %v29 = vld [vmem:[%s0 + $0x18] sm:$0xff]
  %v30 = vld [vmem:[%s1] sm:$0xff]
  %v31 = vld [vmem:[%s2] sm:$0x1]
  %v33 = vlaneseq
  %v34 = vshrl.u32 %v33, 7
  %v35 = vsub.s32 0, %v34
  %v36 = vrot.slane %v31, %v35
  %vm38 = vcmask 64512
  %v40 = vsel %vm38, %v26, 0
  %v43 = vsel %vm38, %v27, 0
  %v46 = vsel %vm38, %v28, 0
  %v49 = vsel %vm38, %v29, 0
  %51 = vmatprep.subr.mxu0 0.0
  %52 = vmatpush1.msra.mxu0 0.0
  %53 = vmatprep.subr.mxu0 0.0
  %54 = vmatpush1.msra.mxu0 0.0
  %55 = vmatprep.subr.mxu0 0.0
  %56 = vmatpush1.msra.mxu0 0.0
  %57 = vmatprep.subr.mxu0 0.0
  %58 = vmatpush1.msra.mxu0 0.0
  %59 = vmatprep.subr.mxu0 0.0
  %60 = vmatpush1.msra.mxu0 0.0
  %61 = vmatprep.subr.mxu0 0.0
  %62 = vmatpush1.msra.mxu0 0.0
  %63 = vmatprep.subr.mxu0 0.0
  %64 = vmatpush1.msra.mxu0 0.0
  %65 = vmatprep.subr.mxu0 0.0
  %66 = vmatpush1.msra.mxu0 0.0
  %67 = vmatprep.subr.mxu0 0.0
  %68 = vmatpush1.msra.mxu0 0.0
  %69 = vmatprep.subr.mxu0 0.0
  %70 = vmatpush1.msra.mxu0 0.0
  %71 = vmatprep.subr.mxu0 0.0
  %72 = vmatpush1.msra.mxu0 0.0
  %73 = vmatprep.subr.mxu0 0.0
  %74 = vmatpush1.msra.mxu0 0.0
  %75 = vmatprep.subr.mxu0 0.0
  %76 = vmatpush1.msra.mxu0 0.0
  %77 = vmatprep.subr.mxu0 0.0
  %78 = vmatpush1.msra.mxu0 0.0
  %79 = vmatprep.subr.mxu0 0.0
  %80 = vmatpush1.msra.mxu0 0.0
  %81 = vmatprep.subr.mxu0 0.0
  %82 = vmatpush1.msra.mxu0 %v30
  %83 = vmatprep.subr.mxu0 0.0
  %84 = vmatpush2.msra.mxu0 0.0
  %85 = vmatprep.subr.mxu0 0.0
  %86 = vmatpush2.msra.mxu0 0.0
  %87 = vmatprep.subr.mxu0 0.0
  %88 = vmatpush2.msra.mxu0 0.0
  %89 = vmatprep.subr.mxu0 0.0
  %90 = vmatpush2.msra.mxu0 0.0
  %91 = vmatprep.subr.mxu0 0.0
  %92 = vmatpush2.msra.mxu0 0.0
  %93 = vmatprep.subr.mxu0 0.0
  %94 = vmatpush2.msra.mxu0 0.0
  %95 = vmatprep.subr.mxu0 0.0
  %96 = vmatpush2.msra.mxu0 0.0
  %97 = vmatprep.subr.mxu0 0.0
  %98 = vmatpush2.msra.mxu0 0.0
  %99 = vmatprep.subr.mxu0 0.0
  %100 = vmatpush2.msra.mxu0 0.0
  %101 = vmatprep.subr.mxu0 0.0
  %102 = vmatpush2.msra.mxu0 0.0
  %103 = vmatprep.subr.mxu0 0.0
  %104 = vmatpush2.msra.mxu0 0.0
  %105 = vmatprep.subr.mxu0 0.0
  %106 = vmatpush2.msra.mxu0 0.0
  %107 = vmatprep.subr.mxu0 0.0
  %108 = vmatpush2.msra.mxu0 0.0
  %109 = vmatprep.subr.mxu0 0.0
  %110 = vmatpush2.msra.mxu0 0.0
  %111 = vmatprep.subr.mxu0 0.0
  %112 = vmatpush2.msra.mxu0 0.0
  %113 = vmatprep.subr.mxu0 0.0
  %114 = vmatpush2.msra.mxu0 0.0
  %115 = vmatprep.mubr.f32.mxu0 0.0
  %116 = vmatmul.mubr.f32.gmra.mxu0 %v40
  %v117 = vpop.f32.mrf.mxu0
  %v118 = vadd.f32 %v36, %v117
  %v119 = vpop.f32.mrf.mxu0
  %120 = vmatprep.mubr.f32.mxu0 0.0
  %121 = vmatmul.mubr.f32.gmra.mxu0 %v43
  %v122 = vpop.f32.mrf.mxu0
  %v123 = vadd.f32 %v36, %v122
  %v124 = vpop.f32.mrf.mxu0
  %125 = vmatprep.mubr.f32.mxu0 0.0
  %126 = vmatmul.mubr.f32.gmra.mxu0 %v46
  %v127 = vpop.f32.mrf.mxu0
  %v128 = vadd.f32 %v36, %v127
  %v129 = vpop.f32.mrf.mxu0
  %130 = vmatprep.mubr.f32.mxu0 0.0
  %131 = vmatmul.mubr.f32.gmra.mxu0 %v49
  %v132 = vpop.f32.mrf.mxu0
  %v133 = vadd.f32 %v36, %v132
  %v134 = vpop.f32.mrf.mxu0
  %135 = vdwg.mxu0
  %v136 = vmax.f32 %v118, 0.0
  %v137 = vmax.f32 %v123, 0.0
  %v138 = vmax.f32 %v128, 0.0
  %v139 = vmax.f32 %v133, 0.0
  %v140 = vld [vmem:[%s3] sm:$0xff]
  %v141 = vld [vmem:[%s3 + $0x8] sm:$0xff]
  %v142 = vld [vmem:[%s3 + $0x10] sm:$0xff]
  %v143 = vld [vmem:[%s3 + $0x18] sm:$0xff]
  %v144 = vld [vmem:[%s3 + $0x20] sm:$0xff]
  %v145 = vld [vmem:[%s3 + $0x28] sm:$0xff]
  %v146 = vld [vmem:[%s3 + $0x30] sm:$0xff]
  %v147 = vld [vmem:[%s3 + $0x38] sm:$0xff]
  %v148 = vld [vmem:[%s3 + $0x40] sm:$0xff]
  %v149 = vld [vmem:[%s3 + $0x48] sm:$0xff]
  %v150 = vld [vmem:[%s3 + $0x50] sm:$0xff]
  %v151 = vld [vmem:[%s3 + $0x58] sm:$0xff]
  %v152 = vld [vmem:[%s3 + $0x60] sm:$0xff]
  %v153 = vld [vmem:[%s3 + $0x68] sm:$0xff]
  %v154 = vld [vmem:[%s3 + $0x70] sm:$0xff]
  %v155 = vld [vmem:[%s3 + $0x78] sm:$0xff]
  %v156 = vld [vmem:[%s4] sm:$0x1]
  %v158 = vlaneseq
  %v159 = vshrl.u32 %v158, 7
  %v160 = vsub.s32 0, %v159
  %v161 = vrot.slane %v156, %v160
  %163 = vmatprep.subr.mxu0 0.0
  %164 = vmatpush1.msra.mxu0 %v155
  %165 = vmatprep.subr.mxu0 0.0
  %166 = vmatpush1.msra.mxu0 %v154
  %167 = vmatprep.subr.mxu0 0.0
  %168 = vmatpush1.msra.mxu0 %v153
  %169 = vmatprep.subr.mxu0 0.0
  %170 = vmatpush1.msra.mxu0 %v152
  %171 = vmatprep.subr.mxu0 0.0
  %172 = vmatpush1.msra.mxu0 %v151
  %173 = vmatprep.subr.mxu0 0.0
  %174 = vmatpush1.msra.mxu0 %v150
  %175 = vmatprep.subr.mxu0 0.0
  %176 = vmatpush1.msra.mxu0 %v149
  %177 = vmatprep.subr.mxu0 0.0
  %178 = vmatpush1.msra.mxu0 %v148
  %179 = vmatprep.subr.mxu0 0.0
  %180 = vmatpush1.msra.mxu0 %v147
  %181 = vmatprep.subr.mxu0 0.0
  %182 = vmatpush1.msra.mxu0 %v146
  %183 = vmatprep.subr.mxu0 0.0
  %184 = vmatpush1.msra.mxu0 %v145
  %185 = vmatprep.subr.mxu0 0.0
  %186 = vmatpush1.msra.mxu0 %v144
  %187 = vmatprep.subr.mxu0 0.0
  %188 = vmatpush1.msra.mxu0 %v143
  %189 = vmatprep.subr.mxu0 0.0
  %190 = vmatpush1.msra.mxu0 %v142
  %191 = vmatprep.subr.mxu0 0.0
  %192 = vmatpush1.msra.mxu0 %v141
  %193 = vmatprep.subr.mxu0 0.0
  %194 = vmatpush1.msra.mxu0 %v140
  %195 = vmatprep.subr.mxu0 0.0
  %196 = vmatpush2.msra.mxu0 0.0
  %197 = vmatprep.subr.mxu0 0.0
  %198 = vmatpush2.msra.mxu0 0.0
  %199 = vmatprep.subr.mxu0 0.0
  %200 = vmatpush2.msra.mxu0 0.0
  %201 = vmatprep.subr.mxu0 0.0
  %202 = vmatpush2.msra.mxu0 0.0
  %203 = vmatprep.subr.mxu0 0.0
  %204 = vmatpush2.msra.mxu0 0.0
  %205 = vmatprep.subr.mxu0 0.0
  %206 = vmatpush2.msra.mxu0 0.0
  %207 = vmatprep.subr.mxu0 0.0
  %208 = vmatpush2.msra.mxu0 0.0
  %209 = vmatprep.subr.mxu0 0.0
  %210 = vmatpush2.msra.mxu0 0.0
  %211 = vmatprep.subr.mxu0 0.0
  %212 = vmatpush2.msra.mxu0 0.0
  %213 = vmatprep.subr.mxu0 0.0
  %214 = vmatpush2.msra.mxu0 0.0
  %215 = vmatprep.subr.mxu0 0.0
  %216 = vmatpush2.msra.mxu0 0.0
  %217 = vmatprep.subr.mxu0 0.0
  %218 = vmatpush2.msra.mxu0 0.0
  %219 = vmatprep.subr.mxu0 0.0
  %220 = vmatpush2.msra.mxu0 0.0
  %221 = vmatprep.subr.mxu0 0.0
  %222 = vmatpush2.msra.mxu0 0.0
  %223 = vmatprep.subr.mxu0 0.0
  %224 = vmatpush2.msra.mxu0 0.0
  %225 = vmatprep.subr.mxu0 0.0
  %226 = vmatpush2.msra.mxu0 0.0
  %227 = vmatprep.mubr.f32.mxu0 0.0
  %228 = vmatmul.mubr.f32.gmra.mxu0 %v136
  %v229 = vpop.f32.mrf.mxu0
  %v230 = vadd.f32 %v161, %v229
  %v231 = vpop.f32.mrf.mxu0
  %232 = vmatprep.mubr.f32.mxu0 0.0
  %233 = vmatmul.mubr.f32.gmra.mxu0 %v137
  %v234 = vpop.f32.mrf.mxu0
  %v235 = vadd.f32 %v161, %v234
  %v236 = vpop.f32.mrf.mxu0
  %237 = vmatprep.mubr.f32.mxu0 0.0
  %238 = vmatmul.mubr.f32.gmra.mxu0 %v138
  %v239 = vpop.f32.mrf.mxu0
  %v240 = vadd.f32 %v161, %v239
  %v241 = vpop.f32.mrf.mxu0
  %242 = vmatprep.mubr.f32.mxu0 0.0
  %243 = vmatmul.mubr.f32.gmra.mxu0 %v139
  %v244 = vpop.f32.mrf.mxu0
  %v245 = vadd.f32 %v161, %v244
  %v246 = vpop.f32.mrf.mxu0
  %247 = vdwg.mxu0
  %v248 = vmax.f32 %v230, 0.0
  %v249 = vmax.f32 %v235, 0.0
  %v250 = vmax.f32 %v240, 0.0
  %v251 = vmax.f32 %v245, 0.0
  %v252 = vld [vmem:[%s5] sm:$0xff]
  %v253 = vld [vmem:[%s5 + $0x8] sm:$0xff]
  %v254 = vld [vmem:[%s5 + $0x10] sm:$0xff]
  %v255 = vld [vmem:[%s5 + $0x18] sm:$0xff]
  %v256 = vld [vmem:[%s5 + $0x20] sm:$0xff]
  %v257 = vld [vmem:[%s5 + $0x28] sm:$0xff]
  %v258 = vld [vmem:[%s5 + $0x30] sm:$0xff]
  %v259 = vld [vmem:[%s5 + $0x38] sm:$0xff]
  %v260 = vld [vmem:[%s5 + $0x40] sm:$0xff]
  %v261 = vld [vmem:[%s5 + $0x48] sm:$0xff]
  %v262 = vld [vmem:[%s5 + $0x50] sm:$0xff]
  %v263 = vld [vmem:[%s5 + $0x58] sm:$0xff]
  %v264 = vld [vmem:[%s5 + $0x60] sm:$0xff]
  %v265 = vld [vmem:[%s5 + $0x68] sm:$0xff]
  %v266 = vld [vmem:[%s5 + $0x70] sm:$0xff]
  %v267 = vld [vmem:[%s5 + $0x78] sm:$0xff]
  %v268 = vld [vmem:[%s6] sm:$0x1]
  %v270 = vlaneseq
  %v271 = vshrl.u32 %v270, 7
  %v272 = vsub.s32 0, %v271
  %v273 = vrot.slane %v268, %v272
  %275 = vmatprep.subr.mxu0 0.0
  %276 = vmatpush1.msra.mxu0 %v267
  %277 = vmatprep.subr.mxu0 0.0
  %278 = vmatpush1.msra.mxu0 %v266
  %279 = vmatprep.subr.mxu0 0.0
  %280 = vmatpush1.msra.mxu0 %v265
  %281 = vmatprep.subr.mxu0 0.0
  %282 = vmatpush1.msra.mxu0 %v264
  %283 = vmatprep.subr.mxu0 0.0
  %284 = vmatpush1.msra.mxu0 %v263
  %285 = vmatprep.subr.mxu0 0.0
  %286 = vmatpush1.msra.mxu0 %v262
  %287 = vmatprep.subr.mxu0 0.0
  %288 = vmatpush1.msra.mxu0 %v261
  %289 = vmatprep.subr.mxu0 0.0
  %290 = vmatpush1.msra.mxu0 %v260
  %291 = vmatprep.subr.mxu0 0.0
  %292 = vmatpush1.msra.mxu0 %v259
  %293 = vmatprep.subr.mxu0 0.0
  %294 = vmatpush1.msra.mxu0 %v258
  %295 = vmatprep.subr.mxu0 0.0
  %296 = vmatpush1.msra.mxu0 %v257
  %297 = vmatprep.subr.mxu0 0.0
  %298 = vmatpush1.msra.mxu0 %v256
  %299 = vmatprep.subr.mxu0 0.0
  %300 = vmatpush1.msra.mxu0 %v255
  %301 = vmatprep.subr.mxu0 0.0
  %302 = vmatpush1.msra.mxu0 %v254
  %303 = vmatprep.subr.mxu0 0.0
  %304 = vmatpush1.msra.mxu0 %v253
  %305 = vmatprep.subr.mxu0 0.0
  %306 = vmatpush1.msra.mxu0 %v252
  %307 = vmatprep.subr.mxu0 0.0
  %308 = vmatpush2.msra.mxu0 0.0
  %309 = vmatprep.subr.mxu0 0.0
  %310 = vmatpush2.msra.mxu0 0.0
  %311 = vmatprep.subr.mxu0 0.0
  %312 = vmatpush2.msra.mxu0 0.0
  %313 = vmatprep.subr.mxu0 0.0
  %314 = vmatpush2.msra.mxu0 0.0
  %315 = vmatprep.subr.mxu0 0.0
  %316 = vmatpush2.msra.mxu0 0.0
  %317 = vmatprep.subr.mxu0 0.0
  %318 = vmatpush2.msra.mxu0 0.0
  %319 = vmatprep.subr.mxu0 0.0
  %320 = vmatpush2.msra.mxu0 0.0
  %321 = vmatprep.subr.mxu0 0.0
  %322 = vmatpush2.msra.mxu0 0.0
  %323 = vmatprep.subr.mxu0 0.0
  %324 = vmatpush2.msra.mxu0 0.0
  %325 = vmatprep.subr.mxu0 0.0
  %326 = vmatpush2.msra.mxu0 0.0
  %327 = vmatprep.subr.mxu0 0.0
  %328 = vmatpush2.msra.mxu0 0.0
  %329 = vmatprep.subr.mxu0 0.0
  %330 = vmatpush2.msra.mxu0 0.0
  %331 = vmatprep.subr.mxu0 0.0
  %332 = vmatpush2.msra.mxu0 0.0
  %333 = vmatprep.subr.mxu0 0.0
  %334 = vmatpush2.msra.mxu0 0.0
  %335 = vmatprep.subr.mxu0 0.0
  %336 = vmatpush2.msra.mxu0 0.0
  %337 = vmatprep.subr.mxu0 0.0
  %338 = vmatpush2.msra.mxu0 0.0
  %339 = vmatprep.mubr.f32.mxu0 0.0
  %340 = vmatmul.mubr.f32.gmra.mxu0 %v248
  %v341 = vpop.f32.mrf.mxu0
  %v342 = vadd.f32 %v273, %v341
  %v343 = vpop.f32.mrf.mxu0
  %344 = vmatprep.mubr.f32.mxu0 0.0
  %345 = vmatmul.mubr.f32.gmra.mxu0 %v249
  %v346 = vpop.f32.mrf.mxu0
  %v347 = vadd.f32 %v273, %v346
  %v348 = vpop.f32.mrf.mxu0
  %349 = vmatprep.mubr.f32.mxu0 0.0
  %350 = vmatmul.mubr.f32.gmra.mxu0 %v250
  %v351 = vpop.f32.mrf.mxu0
  %v352 = vadd.f32 %v273, %v351
  %v353 = vpop.f32.mrf.mxu0
  %354 = vmatprep.mubr.f32.mxu0 0.0
  %355 = vmatmul.mubr.f32.gmra.mxu0 %v251
  %v356 = vpop.f32.mrf.mxu0
  %v357 = vadd.f32 %v273, %v356
  %v358 = vpop.f32.mrf.mxu0
  %359 = vdwg.mxu0
  %360 = vst.msk [vmem:[%s7] sm:$0xff] %vm38, %v342
  %361 = vst.msk [vmem:[%s7 + $0x8] sm:$0xff] %vm38, %v347
  %362 = vst.msk [vmem:[%s7 + $0x10] sm:$0xff] %vm38, %v352
  %363 = vst.msk [vmem:[%s7 + $0x18] sm:$0xff] %vm38, %v357
  // Predicated region
  $region30: #{iris_net_forward.1} parent=0 // pred_check
    _
  $region31: #{iris_net_forward.1} parent=0 // pred_check_branch
    %365 = sbr.rel (0) target = $region33
  $region32: #{iris_net_forward.1} parent=0 // pred_region
    _
  $region33: #{iris_net_forward.1} parent=0 // pred_fallthru
    _
  // Predicated region
  $region34: #{iris_net_forward.1} parent=0 // pred_check
    _
  $region35: #{iris_net_forward.1} parent=0 // pred_check_branch
    %367 = sbr.rel (0) target = $region37
  $region36: #{iris_net_forward.1} parent=0 // pred_region
    _
  $region37: #{iris_net_forward.1} parent=0 // pred_fallthru
    _

</llo_original>
